<compile_context>
chip_gen: v7x
topology: tpu7x:2x2x1
jax: 0.10.0
libtpu: 0.0.40
codegen_flags: <defaults>
</compile_context>

<pallas_src>
import functools

import numpy as np
import jax
import jax.numpy as jnp
from jax.experimental import pallas as pl
from jax.experimental.pallas import tpu as pltpu


def _round_up(x, m):
    return ((x + m - 1) // m) * m


def _coord_kernel(th, tw, emit_hom, emit_norm, *refs):
    """Per-(batch, row-tile, col-tile) block kernel.

    refs layout:
      refs[0]                : flow block  (1, 2, TH, TW) VMEM   (x-flow, y-flow)
      refs[1] (if emit_norm) : K^{-1} flat (B, 9)         SMEM
      remaining              : output blocks (1, 3, TH, TW) VMEM, in order
                               [coord2_hom?][coord1_norm, coord2_norm]?
    """
    flow_ref = refs[0]
    idx = 1
    if emit_norm:
        kinv_ref = refs[idx]
        idx += 1
    out_refs = refs[idx:]

    b = pl.program_id(0)
    y0 = pl.program_id(1) * th          # tile row offset (pixels)
    x0 = pl.program_id(2) * tw          # tile col offset (pixels)

    # Tile-local integer pixel grid + scalar offsets; exact, pure VPU.
    ys = (jax.lax.broadcasted_iota(jnp.int32, (th, tw), 0) + y0).astype(jnp.float32)
    xs = (jax.lax.broadcasted_iota(jnp.int32, (th, tw), 1) + x0).astype(jnp.float32)

    xs2 = xs + flow_ref[0, 0, :, :]
    ys2 = ys + flow_ref[0, 1, :, :]

    o = 0
    if emit_hom:
        c2_ref = out_refs[o]
        o += 1
        c2_ref[0, 0, :, :] = xs2
        c2_ref[0, 1, :, :] = ys2
        # ones channel kept for parity with the torch flow2coord output layout
        c2_ref[0, 2, :, :] = jnp.ones((th, tw), jnp.float32)

    if emit_norm:
        c1n_ref = out_refs[o]
        c2n_ref = out_refs[o + 1]
        # K^{-1} @ [x, y, 1]^T with K^{-1} entries as SMEM scalars:
        # each output channel = 2 scalar*tile FMAs + a scalar add (no XLU relayout,
        # no cross-sublane broadcast).  Keep this form (minimal-VALU) on all gens.
        k = [kinv_ref[b, i] for i in range(9)]
        for xv, yv, out_ref in ((xs, ys, c1n_ref), (xs2, ys2, c2n_ref)):
            for r in range(3):
                out_ref[0, r, :, :] = k[3 * r] * xv + k[3 * r + 1] * yv + k[3 * r + 2]


def _vmem_caps():
    """(double-buffered working-set budget, physical VMEM capacity) in bytes."""
    try:
        cap = int(pltpu.get_tpu_info().vmem_capacity_bytes)
    except Exception:  # pragma: no cover - fallback if query unavailable
        cap = 64 << 20  # conservative (v7x has 64 MiB per TensorCore)
    # Target ~half of physical VMEM for the double-buffered working set, capped
    # at 48 MiB: v7x (64 MiB) -> 32 MiB with compiler headroom; v5e/v6e
    # (128 MiB) -> 48 MiB.
    budget = min(cap // 2, 48 << 20)
    return budget, cap


def _choose_tiles(b, h, w, n_chan, budget_bytes):
    """Pick (TH, TW, Hpad, Wpad): dense (8,128)-aligned tiles sized so the
    double-buffered per-step working set (n_chan f32 channels) stays within
    `budget_bytes`, favouring full-width lane-dense tiles, and keeping >= 4
    grid steps (when possible) so v7x's two TensorCores both get work."""
    wp = _round_up(w, 128)
    tw_cap = 2048
    if wp <= tw_cap:
        tw = wp                       # full width: widest unmasked vst lanes
    else:
        n_w = -(-wp // tw_cap)
        tw = _round_up(-(-wp // n_w), 128)

    # Bytes contributed by one tile row across all in/out channels, x2 buffers.
    row_bytes = tw * n_chan * 4 * 2
    th = min(budget_bytes // row_bytes, 512, _round_up(h, 8))
    th = max(8, (th // 8) * 8)

    def n_steps(th_):
        return b * (-(-h // th_)) * (-(-w // tw))

    while n_steps(th) < 4 and th > 8:
        th = max(8, ((th // 2) // 8) * 8)

    hpad = th * (-(-h // th))
    wpad = tw * (-(-w // tw))
    return th, tw, hpad, wpad


def _coord1_hom_grid(b, h, w):
    """Constant homogeneous pixel grid (identical across batch and calls).
    Built outside the pallas_call so the HBM-write-bound kernel does not
    re-write 3 constant channels per pixel."""
    xs = jax.lax.broadcasted_iota(jnp.float32, (h, w), 1)
    ys = jax.lax.broadcasted_iota(jnp.float32, (h, w), 0)
    grid = jnp.stack([xs, ys, jnp.ones((h, w), jnp.float32)], axis=0)
    return jnp.broadcast_to(grid[None], (b, 3, h, w))


def flow2coord_norm(flow, intrinsic_inv=None, emit_hom=True, emit_norm=True,
                    flat=True):
    """Fused flow2coord + per-batch K^{-1} normalization (torch.bmm).

    flow          : (B, 2, H, W) float  (NCHW, as in PyTorch)
    intrinsic_inv : (B, 3, 3)    float  (required iff emit_norm)
    Returns (each (B, 3, H*W) if flat else (B, 3, H, W)), in order:
      emit_hom : coord1_hom, coord2_hom
      emit_norm: coord1_norm, coord2_norm
    """
    assert emit_hom or emit_norm
    b, c, h, w = flow.shape
    assert c == 2
    flow = flow.astype(jnp.float32)

    n_chan = 2 + (3 if emit_hom else 0) + (6 if emit_norm else 0)
    budget, cap = _vmem_caps()
    th, tw, hpad, wpad = _choose_tiles(b, h, w, n_chan, budget)

    if (hpad, wpad) != (h, w):
        # Pad to (8,128)-aligned tiles: keeps every store unmasked and the
        # pipelined working set bounded for ragged SFM resolutions.
        flow = jnp.pad(flow, ((0, 0), (0, 0), (0, hpad - h), (0, wpad - w)))

    grid = (b, hpad // th, wpad // tw)

    n_out = (1 if emit_hom else 0) + (2 if emit_norm else 0)
    coord_shape = jax.ShapeDtypeStruct((b, 3, hpad, wpad), jnp.float32)
    coord_spec = pl.BlockSpec((1, 3, th, tw), lambda bi, i, j: (bi, 0, i, j))

    in_specs = [pl.BlockSpec((1, 2, th, tw), lambda bi, i, j: (bi, 0, i, j))]
    args = [flow]
    if emit_norm:
        assert intrinsic_inv is not None
        in_specs.append(pl.BlockSpec(memory_space=pltpu.MemorySpace.SMEM))
        args.append(intrinsic_inv.astype(jnp.float32).reshape(b, 9))

    # Scoped-VMEM limit sized to the actual double-buffered working set
    # (+ margin), kept well under physical VMEM on every generation.
    work_db = 2 * th * tw * n_chan * 4
    vmem_limit = int(min(max(work_db + (8 << 20), 32 << 20), cap * 3 // 4))

    outs = pl.pallas_call(
        functools.partial(_coord_kernel, th, tw, emit_hom, emit_norm),
        out_shape=[coord_shape] * n_out,
        grid=grid,
        in_specs=in_specs,
        out_specs=[coord_spec] * n_out,
        compiler_params=pltpu.CompilerParams(
            dimension_semantics=("parallel", "parallel", "parallel"),
            vmem_limit_bytes=vmem_limit),
    )(*args)

    if not isinstance(outs, (list, tuple)):
        outs = [outs]
    outs = list(outs)
    if (hpad, wpad) != (h, w):
        outs = [o[:, :, :h, :w] for o in outs]

    result = []
    if emit_hom:
        result.append(_coord1_hom_grid(b, h, w))   # constant, not kernel-written
        result.append(outs.pop(0))
    if emit_norm:
        result.extend(outs)

    if flat:
        result = [r.reshape(b, 3, h * w) for r in result]
    return tuple(result)


def flow2coord(flow):
    """Exact analogue of the PyTorch flow2coord helper: (coord1_hom, coord2_hom).
    Skips the normalized-coordinate outputs entirely (halves HBM write traffic
    versus routing through the emit_norm path)."""
    return flow2coord_norm(flow, None, emit_hom=True, emit_norm=False)


def _reference(flow, kinv):
    """Plain numpy mirror of flow2coord + torch.bmm(K^{-1}, coord_hom)."""
    flow = np.asarray(flow, np.float32)
    kinv = np.asarray(kinv, np.float32)
    b, _, h, w = flow.shape
    coord1 = np.zeros_like(flow)
    coord1[:, 0, :, :] += np.arange(w, dtype=np.float32)
    coord1[:, 1, :, :] += np.arange(h, dtype=np.float32)[:, None]
    coord2 = coord1 + flow
    c1 = coord1.reshape(b, 2, h * w)
    c2 = coord2.reshape(b, 2, h * w)
    ones = np.ones((b, 1, h * w), np.float32)
    c1h = np.concatenate([c1, ones], axis=1)
    c2h = np.concatenate([c2, ones], axis=1)
    c1n = np.einsum("bij,bjn->bin", kinv, c1h)
    c2n = np.einsum("bij,bjn->bin", kinv, c2h)
    return c1h, c2h, c1n, c2n


def _make_intrinsics(b, h, w):
    intrinsic = jnp.zeros((b, 3, 3), jnp.float32)
    intrinsic = intrinsic.at[:, 0, 0].set(200.0 + jnp.arange(b, dtype=jnp.float32))
    intrinsic = intrinsic.at[:, 1, 1].set(220.0 + jnp.arange(b, dtype=jnp.float32))
    intrinsic = intrinsic.at[:, 0, 2].set((w - 1) / 2.0)
    intrinsic = intrinsic.at[:, 1, 2].set((h - 1) / 2.0)
    intrinsic = intrinsic.at[:, 2, 2].set(1.0)
    return intrinsic


if __name__ == "__main__":
    key = jax.random.PRNGKey(0)

    def check(got_list, want_list):
        for got, want in zip(got_list, want_list):
            err = np.max(np.abs(np.asarray(got) - np.asarray(want)))
            assert np.allclose(np.asarray(got), want, atol=1e-4, rtol=1e-4), err

    # Case 1: aligned shape (H mult of 8, W mult of 128) — no padding path.
    b, h, w = 2, 48, 384
    k1, k2 = jax.random.split(key)
    flow = jax.random.normal(k1, (b, 2, h, w), jnp.float32) * 2.0
    intrinsic_inv = jnp.linalg.inv(_make_intrinsics(b, h, w))  # torch.inverse analogue
    refs = _reference(np.asarray(flow), np.asarray(intrinsic_inv))

    outs = jax.block_until_ready(
        flow2coord_norm(flow, intrinsic_inv, emit_hom=True, emit_norm=True))
    check(outs, refs)

    outs_n = jax.block_until_ready(
        flow2coord_norm(flow, intrinsic_inv, emit_hom=False, emit_norm=True))
    check(outs_n, refs[2:])

    outs_h = jax.block_until_ready(flow2coord(flow))
    check(outs_h, refs[:2])

    # Case 2: ragged shape — exercises the H/W padding + slice path.
    b2, h2, w2 = 2, 20, 150
    flow2 = jax.random.normal(k2, (b2, 2, h2, w2), jnp.float32) * 2.0
    intrinsic_inv2 = jnp.linalg.inv(_make_intrinsics(b2, h2, w2))
    refs2 = _reference(np.asarray(flow2), np.asarray(intrinsic_inv2))

    outs2 = jax.block_until_ready(
        flow2coord_norm(flow2, intrinsic_inv2, emit_hom=True, emit_norm=True))
    check(outs2, refs2)

    print("KERNEL_OK")
</pallas_src>

<mosaic_0001>
module attributes {stable_mosaic.version = 11 : i64} {
  func.func @_coord_kernel(%arg0: i32, %arg1: i32, %arg2: i32, %arg3: memref<1x2x24x384xf32, #tpu.memory_space<vmem>>, %arg4: memref<2x9xf32, #tpu.memory_space<smem>>, %arg5: memref<1x3x24x384xf32, #tpu.memory_space<vmem>>, %arg6: memref<1x3x24x384xf32, #tpu.memory_space<vmem>>, %arg7: memref<1x3x24x384xf32, #tpu.memory_space<vmem>>) attributes {dimension_semantics = [#tpu.dimension_semantics<parallel>, #tpu.dimension_semantics<parallel>, #tpu.dimension_semantics<parallel>], iteration_bounds = array<i64: 2, 2, 1>, scalar_prefetch = 0 : i64, scratch_operands = 0 : i64, tpu.core_type = #tpu.core_type<tc>, window_params = [{transform_indices = @transform_0, window_bounds = array<i64: 1, 2, 24, 384>}, {transform_indices = @transform_1, window_bounds = array<i64: 2, 9>}, {transform_indices = @transform_2, window_bounds = array<i64: 1, 3, 24, 384>}, {transform_indices = @transform_3, window_bounds = array<i64: 1, 3, 24, 384>}, {transform_indices = @transform_4, window_bounds = array<i64: 1, 3, 24, 384>}]} {
    %c24_i32 = arith.constant 24 : i32
    %0 = arith.muli %arg1, %c24_i32 : i32
    %c384_i32 = arith.constant 384 : i32
    %1 = arith.muli %arg2, %c384_i32 : i32
    %2 = tpu.iota {dimensions = array<i32: 0>} : vector<24x384xi32>
    %3 = vector.broadcast %0 : i32 to vector<24x384xi32>
    %4 = arith.addi %2, %3 : vector<24x384xi32>
    %5 = arith.sitofp %4 : vector<24x384xi32> to vector<24x384xf32>
    %6 = tpu.iota {dimensions = array<i32: 1>} : vector<24x384xi32>
    %7 = vector.broadcast %1 : i32 to vector<24x384xi32>
    %8 = arith.addi %6, %7 : vector<24x384xi32>
    %9 = arith.sitofp %8 : vector<24x384xi32> to vector<24x384xf32>
    %c0 = arith.constant 0 : index
    %c0_0 = arith.constant 0 : index
    %c0_1 = arith.constant 0 : index
    %c0_2 = arith.constant 0 : index
    %10 = vector.load %arg3[%c0, %c0_0, %c0_1, %c0_2] : memref<1x2x24x384xf32, #tpu.memory_space<vmem>>, vector<1x1x24x384xf32>
    %11 = vector.shape_cast %10 : vector<1x1x24x384xf32> to vector<24x384xf32>
    %12 = arith.addf %9, %11 : vector<24x384xf32>
    %c0_3 = arith.constant 0 : index
    %c1 = arith.constant 1 : index
    %c0_4 = arith.constant 0 : index
    %c0_5 = arith.constant 0 : index
    %13 = vector.load %arg3[%c0_3, %c1, %c0_4, %c0_5] : memref<1x2x24x384xf32, #tpu.memory_space<vmem>>, vector<1x1x24x384xf32>
    %14 = vector.shape_cast %13 : vector<1x1x24x384xf32> to vector<24x384xf32>
    %15 = arith.addf %5, %14 : vector<24x384xf32>
    %c0_6 = arith.constant 0 : index
    %c0_7 = arith.constant 0 : index
    %c0_8 = arith.constant 0 : index
    %c0_9 = arith.constant 0 : index
    %16 = vector.load %arg5[%c0_6, %c0_7, %c0_8, %c0_9] : memref<1x3x24x384xf32, #tpu.memory_space<vmem>>, vector<1x1x24x384xf32>
    %17 = vector.shape_cast %16 : vector<1x1x24x384xf32> to vector<24x384xf32>
    %18 = vector.shape_cast %12 : vector<24x384xf32> to vector<1x1x24x384xf32>
    tpu.vector_store %arg5[%c0_6, %c0_7, %c0_8, %c0_9], %18 {strides = array<i32>} : memref<1x3x24x384xf32, #tpu.memory_space<vmem>>, vector<1x1x24x384xf32>,
    %c0_10 = arith.constant 0 : index
    %c1_11 = arith.constant 1 : index
    %c0_12 = arith.constant 0 : index
    %c0_13 = arith.constant 0 : index
    %19 = vector.load %arg5[%c0_10, %c1_11, %c0_12, %c0_13] : memref<1x3x24x384xf32, #tpu.memory_space<vmem>>, vector<1x1x24x384xf32>
    %20 = vector.shape_cast %19 : vector<1x1x24x384xf32> to vector<24x384xf32>
    %21 = vector.shape_cast %15 : vector<24x384xf32> to vector<1x1x24x384xf32>
    tpu.vector_store %arg5[%c0_10, %c1_11, %c0_12, %c0_13], %21 {strides = array<i32>} : memref<1x3x24x384xf32, #tpu.memory_space<vmem>>, vector<1x1x24x384xf32>,
    %cst = arith.constant 1.000000e+00 : f32
    %22 = vector.broadcast %cst : f32 to vector<24x384xf32>
    %c0_14 = arith.constant 0 : index
    %c2 = arith.constant 2 : index
    %c0_15 = arith.constant 0 : index
    %c0_16 = arith.constant 0 : index
    %23 = vector.load %arg5[%c0_14, %c2, %c0_15, %c0_16] : memref<1x3x24x384xf32, #tpu.memory_space<vmem>>, vector<1x1x24x384xf32>
    %24 = vector.shape_cast %23 : vector<1x1x24x384xf32> to vector<24x384xf32>
    %25 = vector.shape_cast %22 : vector<24x384xf32> to vector<1x1x24x384xf32>
    tpu.vector_store %arg5[%c0_14, %c2, %c0_15, %c0_16], %25 {strides = array<i32>} : memref<1x3x24x384xf32, #tpu.memory_space<vmem>>, vector<1x1x24x384xf32>,
    %26 = arith.index_cast %arg0 : i32 to index
    %c0_17 = arith.constant 0 : index
    %27 = memref.load %arg4[%26, %c0_17] : memref<2x9xf32, #tpu.memory_space<smem>>
    %28 = arith.index_cast %arg0 : i32 to index
    %c1_18 = arith.constant 1 : index
    %29 = memref.load %arg4[%28, %c1_18] : memref<2x9xf32, #tpu.memory_space<smem>>
    %30 = arith.index_cast %arg0 : i32 to index
    %c2_19 = arith.constant 2 : index
    %31 = memref.load %arg4[%30, %c2_19] : memref<2x9xf32, #tpu.memory_space<smem>>
    %32 = arith.index_cast %arg0 : i32 to index
    %c3 = arith.constant 3 : index
    %33 = memref.load %arg4[%32, %c3] : memref<2x9xf32, #tpu.memory_space<smem>>
    %34 = arith.index_cast %arg0 : i32 to index
    %c4 = arith.constant 4 : index
    %35 = memref.load %arg4[%34, %c4] : memref<2x9xf32, #tpu.memory_space<smem>>
    %36 = arith.index_cast %arg0 : i32 to index
    %c5 = arith.constant 5 : index
    %37 = memref.load %arg4[%36, %c5] : memref<2x9xf32, #tpu.memory_space<smem>>
    %38 = arith.index_cast %arg0 : i32 to index
    %c6 = arith.constant 6 : index
    %39 = memref.load %arg4[%38, %c6] : memref<2x9xf32, #tpu.memory_space<smem>>
    %40 = arith.index_cast %arg0 : i32 to index
    %c7 = arith.constant 7 : index
    %41 = memref.load %arg4[%40, %c7] : memref<2x9xf32, #tpu.memory_space<smem>>
    %42 = arith.index_cast %arg0 : i32 to index
    %c8 = arith.constant 8 : index
    %43 = memref.load %arg4[%42, %c8] : memref<2x9xf32, #tpu.memory_space<smem>>
    %44 = vector.broadcast %27 : f32 to vector<24x384xf32>
    %45 = arith.mulf %44, %9 : vector<24x384xf32>
    %46 = vector.broadcast %29 : f32 to vector<24x384xf32>
    %47 = arith.mulf %46, %5 : vector<24x384xf32>
    %48 = arith.addf %45, %47 : vector<24x384xf32>
    %49 = vector.broadcast %31 : f32 to vector<24x384xf32>
    %50 = arith.addf %48, %49 : vector<24x384xf32>
    %c0_20 = arith.constant 0 : index
    %c0_21 = arith.constant 0 : index
    %c0_22 = arith.constant 0 : index
    %c0_23 = arith.constant 0 : index
    %51 = vector.load %arg6[%c0_20, %c0_21, %c0_22, %c0_23] : memref<1x3x24x384xf32, #tpu.memory_space<vmem>>, vector<1x1x24x384xf32>
    %52 = vector.shape_cast %51 : vector<1x1x24x384xf32> to vector<24x384xf32>
    %53 = vector.shape_cast %50 : vector<24x384xf32> to vector<1x1x24x384xf32>
    tpu.vector_store %arg6[%c0_20, %c0_21, %c0_22, %c0_23], %53 {strides = array<i32>} : memref<1x3x24x384xf32, #tpu.memory_space<vmem>>, vector<1x1x24x384xf32>,
    %54 = vector.broadcast %33 : f32 to vector<24x384xf32>
    %55 = arith.mulf %54, %9 : vector<24x384xf32>
    %56 = vector.broadcast %35 : f32 to vector<24x384xf32>
    %57 = arith.mulf %56, %5 : vector<24x384xf32>
    %58 = arith.addf %55, %57 : vector<24x384xf32>
    %59 = vector.broadcast %37 : f32 to vector<24x384xf32>
    %60 = arith.addf %58, %59 : vector<24x384xf32>
    %c0_24 = arith.constant 0 : index
    %c1_25 = arith.constant 1 : index
    %c0_26 = arith.constant 0 : index
    %c0_27 = arith.constant 0 : index
    %61 = vector.load %arg6[%c0_24, %c1_25, %c0_26, %c0_27] : memref<1x3x24x384xf32, #tpu.memory_space<vmem>>, vector<1x1x24x384xf32>
    %62 = vector.shape_cast %61 : vector<1x1x24x384xf32> to vector<24x384xf32>
    %63 = vector.shape_cast %60 : vector<24x384xf32> to vector<1x1x24x384xf32>
    tpu.vector_store %arg6[%c0_24, %c1_25, %c0_26, %c0_27], %63 {strides = array<i32>} : memref<1x3x24x384xf32, #tpu.memory_space<vmem>>, vector<1x1x24x384xf32>,
    %64 = vector.broadcast %39 : f32 to vector<24x384xf32>
    %65 = arith.mulf %64, %9 : vector<24x384xf32>
    %66 = vector.broadcast %41 : f32 to vector<24x384xf32>
    %67 = arith.mulf %66, %5 : vector<24x384xf32>
    %68 = arith.addf %65, %67 : vector<24x384xf32>
    %69 = vector.broadcast %43 : f32 to vector<24x384xf32>
    %70 = arith.addf %68, %69 : vector<24x384xf32>
    %c0_28 = arith.constant 0 : index
    %c2_29 = arith.constant 2 : index
    %c0_30 = arith.constant 0 : index
    %c0_31 = arith.constant 0 : index
    %71 = vector.load %arg6[%c0_28, %c2_29, %c0_30, %c0_31] : memref<1x3x24x384xf32, #tpu.memory_space<vmem>>, vector<1x1x24x384xf32>
    %72 = vector.shape_cast %71 : vector<1x1x24x384xf32> to vector<24x384xf32>
    %73 = vector.shape_cast %70 : vector<24x384xf32> to vector<1x1x24x384xf32>
    tpu.vector_store %arg6[%c0_28, %c2_29, %c0_30, %c0_31], %73 {strides = array<i32>} : memref<1x3x24x384xf32, #tpu.memory_space<vmem>>, vector<1x1x24x384xf32>,
    %74 = vector.broadcast %27 : f32 to vector<24x384xf32>
    %75 = arith.mulf %74, %12 : vector<24x384xf32>
    %76 = vector.broadcast %29 : f32 to vector<24x384xf32>
    %77 = arith.mulf %76, %15 : vector<24x384xf32>
    %78 = arith.addf %75, %77 : vector<24x384xf32>
    %79 = vector.broadcast %31 : f32 to vector<24x384xf32>
    %80 = arith.addf %78, %79 : vector<24x384xf32>
    %c0_32 = arith.constant 0 : index
    %c0_33 = arith.constant 0 : index
    %c0_34 = arith.constant 0 : index
    %c0_35 = arith.constant 0 : index
    %81 = vector.load %arg7[%c0_32, %c0_33, %c0_34, %c0_35] : memref<1x3x24x384xf32, #tpu.memory_space<vmem>>, vector<1x1x24x384xf32>
    %82 = vector.shape_cast %81 : vector<1x1x24x384xf32> to vector<24x384xf32>
    %83 = vector.shape_cast %80 : vector<24x384xf32> to vector<1x1x24x384xf32>
    tpu.vector_store %arg7[%c0_32, %c0_33, %c0_34, %c0_35], %83 {strides = array<i32>} : memref<1x3x24x384xf32, #tpu.memory_space<vmem>>, vector<1x1x24x384xf32>,
    %84 = vector.broadcast %33 : f32 to vector<24x384xf32>
    %85 = arith.mulf %84, %12 : vector<24x384xf32>
    %86 = vector.broadcast %35 : f32 to vector<24x384xf32>
    %87 = arith.mulf %86, %15 : vector<24x384xf32>
    %88 = arith.addf %85, %87 : vector<24x384xf32>
    %89 = vector.broadcast %37 : f32 to vector<24x384xf32>
    %90 = arith.addf %88, %89 : vector<24x384xf32>
    %c0_36 = arith.constant 0 : index
    %c1_37 = arith.constant 1 : index
    %c0_38 = arith.constant 0 : index
    %c0_39 = arith.constant 0 : index
    %91 = vector.load %arg7[%c0_36, %c1_37, %c0_38, %c0_39] : memref<1x3x24x384xf32, #tpu.memory_space<vmem>>, vector<1x1x24x384xf32>
    %92 = vector.shape_cast %91 : vector<1x1x24x384xf32> to vector<24x384xf32>
    %93 = vector.shape_cast %90 : vector<24x384xf32> to vector<1x1x24x384xf32>
    tpu.vector_store %arg7[%c0_36, %c1_37, %c0_38, %c0_39], %93 {strides = array<i32>} : memref<1x3x24x384xf32, #tpu.memory_space<vmem>>, vector<1x1x24x384xf32>,
    %94 = vector.broadcast %39 : f32 to vector<24x384xf32>
    %95 = arith.mulf %94, %12 : vector<24x384xf32>
    %96 = vector.broadcast %41 : f32 to vector<24x384xf32>
    %97 = arith.mulf %96, %15 : vector<24x384xf32>
    %98 = arith.addf %95, %97 : vector<24x384xf32>
    %99 = vector.broadcast %43 : f32 to vector<24x384xf32>
    %100 = arith.addf %98, %99 : vector<24x384xf32>
    %c0_40 = arith.constant 0 : index
    %c2_41 = arith.constant 2 : index
    %c0_42 = arith.constant 0 : index
    %c0_43 = arith.constant 0 : index
    %101 = vector.load %arg7[%c0_40, %c2_41, %c0_42, %c0_43] : memref<1x3x24x384xf32, #tpu.memory_space<vmem>>, vector<1x1x24x384xf32>
    %102 = vector.shape_cast %101 : vector<1x1x24x384xf32> to vector<24x384xf32>
    %103 = vector.shape_cast %100 : vector<24x384xf32> to vector<1x1x24x384xf32>
    tpu.vector_store %arg7[%c0_40, %c2_41, %c0_42, %c0_43], %103 {strides = array<i32>} : memref<1x3x24x384xf32, #tpu.memory_space<vmem>>, vector<1x1x24x384xf32>,
    return
  }
  func.func @transform_0(%arg0: i32, %arg1: i32, %arg2: i32) -> (i32, i32, i32, i32) {
    %c0_i32 = arith.constant 0 : i32
    %c0_i32_0 = arith.constant 0 : i32
    return %arg0, %c0_i32, %arg1, %arg2 : i32, i32, i32, i32
  }
  func.func @transform_1(%arg0: i32, %arg1: i32, %arg2: i32) -> (i32, i32) {
    %c0_i32 = arith.constant 0 : i32
    %c0_i32_0 = arith.constant 0 : i32
    %c0_i32_1 = arith.constant 0 : i32
    return %c0_i32, %c0_i32_0 : i32, i32
  }
  func.func @transform_2(%arg0: i32, %arg1: i32, %arg2: i32) -> (i32, i32, i32, i32) {
    %c0_i32 = arith.constant 0 : i32
    %c0_i32_0 = arith.constant 0 : i32
    return %arg0, %c0_i32, %arg1, %arg2 : i32, i32, i32, i32
  }
  func.func @transform_3(%arg0: i32, %arg1: i32, %arg2: i32) -> (i32, i32, i32, i32) {
    %c0_i32 = arith.constant 0 : i32
    %c0_i32_0 = arith.constant 0 : i32
    return %arg0, %c0_i32, %arg1, %arg2 : i32, i32, i32, i32
  }
  func.func @transform_4(%arg0: i32, %arg1: i32, %arg2: i32) -> (i32, i32, i32, i32) {
    %c0_i32 = arith.constant 0 : i32
    %c0_i32_0 = arith.constant 0 : i32
    return %arg0, %c0_i32, %arg1, %arg2 : i32, i32, i32, i32
  }
}

</mosaic_0001>

<llo_original>
// kernel: tpu_custom_call.1
$region0: #{tpu_custom_call.1}
  #allocation0 [shape = 'u32[]', space=smem, size = 0x4, offset = 0x4, fixed_abs, tag = 'smem constant byte address 0x4 - core index']
  #allocation1 [shape = 'u32[144,128]{1,0:T(1,128)}', space=vmem, size = 0x12000, scoped, tag = 'internal scratch']
  #allocation11 [shape = 's32[]', space=sflag, size = 0x4, offset = 0, fixed_abs, tag = 'sflag constant byte address 0x0 - dummy sync flag']
  #allocation13 [shape = 's32[]', space=sflag, size = 0x4, offset = 0, fixed_abs, tag = 'sflag constant byte address 0x0 - dummy sync flag']
  #allocation15 [shape = 's32[]', space=sflag, size = 0x4, offset = 0, fixed_abs, tag = 'sflag constant byte address 0x0 - dummy sync flag']
  #allocation17 [shape = 's32[]', space=sflag, size = 0x4, offset = 0, fixed_abs, tag = 'sflag constant byte address 0x0 - dummy sync flag']
  %s0 = inlined_call_operand.hbm [shape: f32[2,2,48,384], index: 0, kind: input, shape index: {}]
  %s1 = inlined_call_operand.vmem [shape: f32[2,9], index: 1, kind: input, shape index: {}]
  %s2 = inlined_call_operand.hbm [shape: f32[2,3,48,384], index: 2, kind: output, shape index: {0}]
  %s3 = inlined_call_operand.hbm [shape: f32[2,3,48,384], index: 3, kind: output, shape index: {1}]
  %s4 = inlined_call_operand.hbm [shape: f32[2,3,48,384], index: 4, kind: output, shape index: {2}]
  %5 = xla_tuple %s2, %s3, %s4
  %s6 = sld [smem:[#allocation0]]
  $region65: #{tpu_custom_call.1} parent=0
    _
  %s8 = ssub.s32 1, %s6
  %s9 = scalar_select 0, %s8, %s6
  $region1: #{tpu_custom_call.1} parent=0
    #allocation2 [shape = 'u8[147456]{0}', space=vmem, size = 0x24000, scoped, tag = 'input window, operand 0']
    #allocation3 [shape = 's32[2]{0}', space=sflag, size = 0x8, scoped, tag = 'scoped memory for tpu_custom_call.1']
    #allocation4 [shape = 's32[2]{0}', space=sflag, size = 0x8, scoped, tag = 'scoped memory for tpu_custom_call.1']
    #allocation5 [shape = 's32[2]{0}', space=sflag, size = 0x8, scoped, tag = 'scoped memory for tpu_custom_call.1']
    #allocation6 [shape = 'u8[1024]{0}', space=smem, size = 0x400, scoped, tag = 'input window, operand 1, single buffered']
    #allocation7 [shape = 'u8[221184]{0}', space=vmem, size = 0x36000, scoped, tag = 'output window, operand 0']
    #allocation8 [shape = 'u8[221184]{0}', space=vmem, size = 0x36000, scoped, tag = 'output window, operand 1']
    #allocation9 [shape = 's32[2]{0}', space=sflag, size = 0x8, scoped, tag = 'scoped memory for tpu_custom_call.1']
    #allocation10 [shape = 'u8[221184]{0}', space=vmem, size = 0x36000, scoped, tag = 'output window, operand 2']
    %10 = vsyncpa [#allocation3], 0
    %s11 = scalar_lea.sflag [#allocation3], 1
    %12 = vsyncpa %s11, 0
    %13 = vsyncpa [#allocation5], 0
    %14 = vsyncpa [#allocation4], 0
    %s15 = scalar_lea.sflag [#allocation4], 1
    %16 = vsyncpa %s15, 0
    %17 = vsyncpa [#allocation9], 0
    %s18 = scalar_lea.sflag [#allocation9], 1
    %19 = vsyncpa %s18, 0
    loop: start=0, step=1, limit=6
    $region2: #{tpu_custom_call.1} parent=1 // loop_pre_header
      _
    $region3: #{tpu_custom_call.1} parent=1 // loop_header
      %s21 = sphi 0, %s25
      %p22 = scmp.ge.s32.totalorder %s21, 6
      %s28 = sphi 0, %s47
      %s29 = sphi 0, %s43
      %s30 = sphi 0, %s39
      %s31 = sphi 0, %s28
      %s32 = sphi 0, %s29
      %s33 = sphi 0, %s30
      %s34 = sphi 0, %s31
      %s35 = sphi 0, %s32
      %s36 = sphi 0, %s33
      %s54 = sphi 0, %s56
      %s57 = sphi 0, %s54
      %s58 = sphi 0, %s57
      %s74 = sphi 0, %s58
      %s78 = sphi 0, %s78
      %s80 = sphi 0, %s78
      %s81 = sphi 0, %s80
      %s95 = sphi 0, %s81
      %s105 = sphi 0, %s107
      %s108 = sphi 0, %s105
      %s109 = sphi 0, %s108
      %s125 = sphi 0, %s109
      %s135 = sphi 0, %s137
      %s138 = sphi 0, %s135
      %s139 = sphi 0, %s138
      %s155 = sphi 0, %s139
      %s165 = sphi 0, %s167
      %s168 = sphi 0, %s165
      %s169 = sphi 0, %s168
      %s185 = sphi 0, %s169
    $region4: #{tpu_custom_call.1} parent=1 // loop_header_branch
      %24 = sbr.rel (%p22) target = $region8
    $region5: #{tpu_custom_call.1} parent=1 // loop_body
      %s26 = ssub.s32 %s21, 1
      %s27 = ssub.s32 %s21, 2
      %s37 = sadd.s32 1, %s30
      %p38 = scmp.ge.s32.totalorder %s37, 1
      %s39 = scalar_select %p38, 0, %s37
      %s40 = sadd.s32 1, %s29
      %s41 = scalar_select %p38, %s40, %s29
      %p42 = scmp.ge.s32.totalorder %s41, 2
      %s43 = scalar_select %p42, 0, %s41
      %s44 = sadd.s32 1, %s28
      %s45 = scalar_select %p42, %s44, %s28
      %p46 = scmp.ge.s32.totalorder %s45, 2
      %s47 = scalar_select %p46, 0, %s45
      %s48 = ssub.s32 %s28, %s47
      %s49 = ssub.s32 %s29, %s43
      %s50 = sor.u32 %s48, %s49
      %s51 = ssub.s32 %s30, %s39
      %s52 = sor.u32 %s50, %s51
      %p53 = scmp.eq.s32.totalorder %s52, 0
      %s55 = sadd.s32 %s54, 1
      %s56 = scalar_select %p53, %s54, %s55
      %p59 = pneg %p53
      %p60 = scmp.eq.s32.totalorder %s21, 3
      %p61 = por %p59, %p60
      %p62 = scmp.ne.s32.totalorder %s54, %s57
      %p63 = scmp.eq.s32.totalorder %s21, 0
      %p64 = por %p62, %p63
      %p65 = scmp.ne.s32.totalorder %s54, %s57
      %p66 = scmp.eq.s32.totalorder %s26, 3
      %p67 = por %p65, %p66
      %p68 = scmp.ne.s32.totalorder %s57, %s58
      %p69 = scmp.eq.s32.totalorder %s26, 0
      %p70 = por %p68, %p69
      %p71 = scmp.ne.s32.totalorder %s57, %s58
      %p72 = scmp.eq.s32.totalorder %s27, 3
      %p73 = por %p71, %p72
      %p75 = scmp.ne.s32.totalorder %s58, %s74
      %p76 = scmp.eq.s32.totalorder %s27, 0
      %p77 = por %p75, %p76
      %s79 = sadd.s32 %s78, 1
      %p82 = scmp.eq.s32.totalorder %s21, 3
      %p83 = scmp.ne.s32.totalorder %s78, %s80
      %p84 = scmp.eq.s32.totalorder %s21, 0
      %p85 = por %p83, %p84
      %p86 = scmp.ne.s32.totalorder %s78, %s80
      %p87 = scmp.eq.s32.totalorder %s26, 3
      %p88 = por %p86, %p87
      %p89 = scmp.ne.s32.totalorder %s80, %s81
      %p90 = scmp.eq.s32.totalorder %s26, 0
      %p91 = por %p89, %p90
      %p92 = scmp.ne.s32.totalorder %s80, %s81
      %p93 = scmp.eq.s32.totalorder %s27, 3
      %p94 = por %p92, %p93
      %p96 = scmp.ne.s32.totalorder %s81, %s95
      %p97 = scmp.eq.s32.totalorder %s27, 0
      %p98 = por %p96, %p97
      %s99 = ssub.s32 %s28, %s47
      %s100 = ssub.s32 %s29, %s43
      %s101 = sor.u32 %s99, %s100
      %s102 = ssub.s32 %s30, %s39
      %s103 = sor.u32 %s101, %s102
      %p104 = scmp.eq.s32.totalorder %s103, 0
      %s106 = sadd.s32 %s105, 1
      %s107 = scalar_select %p104, %s105, %s106
      %p110 = pneg %p104
      %p111 = scmp.eq.s32.totalorder %s21, 3
      %p112 = por %p110, %p111
      %p113 = scmp.ne.s32.totalorder %s105, %s108
      %p114 = scmp.eq.s32.totalorder %s21, 0
      %p115 = por %p113, %p114
      %p116 = scmp.ne.s32.totalorder %s105, %s108
      %p117 = scmp.eq.s32.totalorder %s26, 3
      %p118 = por %p116, %p117
      %p119 = scmp.ne.s32.totalorder %s108, %s109
      %p120 = scmp.eq.s32.totalorder %s26, 0
      %p121 = por %p119, %p120
      %p122 = scmp.ne.s32.totalorder %s108, %s109
      %p123 = scmp.eq.s32.totalorder %s27, 3
      %p124 = por %p122, %p123
      %p126 = scmp.ne.s32.totalorder %s109, %s125
      %p127 = scmp.eq.s32.totalorder %s27, 0
      %p128 = por %p126, %p127
      %s129 = ssub.s32 %s28, %s47
      %s130 = ssub.s32 %s29, %s43
      %s131 = sor.u32 %s129, %s130
      %s132 = ssub.s32 %s30, %s39
      %s133 = sor.u32 %s131, %s132
      %p134 = scmp.eq.s32.totalorder %s133, 0
      %s136 = sadd.s32 %s135, 1
      %s137 = scalar_select %p134, %s135, %s136
      %p140 = pneg %p134
      %p141 = scmp.eq.s32.totalorder %s21, 3
      %p142 = por %p140, %p141
      %p143 = scmp.ne.s32.totalorder %s135, %s138
      %p144 = scmp.eq.s32.totalorder %s21, 0
      %p145 = por %p143, %p144
      %p146 = scmp.ne.s32.totalorder %s135, %s138
      %p147 = scmp.eq.s32.totalorder %s26, 3
      %p148 = por %p146, %p147
      %p149 = scmp.ne.s32.totalorder %s138, %s139
      %p150 = scmp.eq.s32.totalorder %s26, 0
      %p151 = por %p149, %p150
      %p152 = scmp.ne.s32.totalorder %s138, %s139
      %p153 = scmp.eq.s32.totalorder %s27, 3
      %p154 = por %p152, %p153
      %p156 = scmp.ne.s32.totalorder %s139, %s155
      %p157 = scmp.eq.s32.totalorder %s27, 0
      %p158 = por %p156, %p157
      %s159 = ssub.s32 %s28, %s47
      %s160 = ssub.s32 %s29, %s43
      %s161 = sor.u32 %s159, %s160
      %s162 = ssub.s32 %s30, %s39
      %s163 = sor.u32 %s161, %s162
      %p164 = scmp.eq.s32.totalorder %s163, 0
      %s166 = sadd.s32 %s165, 1
      %s167 = scalar_select %p164, %s165, %s166
      %p170 = pneg %p164
      %p171 = scmp.eq.s32.totalorder %s21, 3
      %p172 = por %p170, %p171
      %p173 = scmp.ne.s32.totalorder %s165, %s168
      %p174 = scmp.eq.s32.totalorder %s21, 0
      %p175 = por %p173, %p174
      %p176 = scmp.ne.s32.totalorder %s165, %s168
      %p177 = scmp.eq.s32.totalorder %s26, 3
      %p178 = por %p176, %p177
      %p179 = scmp.ne.s32.totalorder %s168, %s169
      %p180 = scmp.eq.s32.totalorder %s26, 0
      %p181 = por %p179, %p180
      %p182 = scmp.ne.s32.totalorder %s168, %s169
      %p183 = scmp.eq.s32.totalorder %s27, 3
      %p184 = por %p182, %p183
      %p186 = scmp.ne.s32.totalorder %s169, %s185
      %p187 = scmp.eq.s32.totalorder %s27, 0
      %p188 = por %p186, %p187
      %p189 = scmp.le.s32.totalorder 1, %s21
      %p190 = scmp.lt.s32.totalorder %s21, 5
      %p191 = pnand %p189, %p190
      %p192 = pneg %p191
      // Predicated region
      $region9: #{tpu_custom_call.1} parent=5 // pred_check
        _
      $region10: #{tpu_custom_call.1} parent=5 // pred_check_branch
        %194 = sbr.rel (%p191) target = $region12
      $region11: #{tpu_custom_call.1} parent=5 // pred_region
        %s195 = ssub.s32 %s21, 1
        // Predicated region
        $region13: #{tpu_custom_call.1} parent=11 // pred_check
          %p196 = pneg %p91
        $region14: #{tpu_custom_call.1} parent=11 // pred_check_branch
          %198 = sbr.rel (%p196) target = $region16
        $region15: #{tpu_custom_call.1} parent=11 // pred_region
          %s200 = ssub.s32 32, 32
          %201 = vsyncadd [#allocation5], %s200
          %s203 = sshll.u32 %s1, 4
          %s204 = int_to_ptr.vmem [resolvable:$true] %s203
          %206 = dma.vmem_to_smem %s204, 32, [#allocation6], [#allocation5]
        $region16: #{tpu_custom_call.1} parent=11 // pred_fallthru
          _
      $region12: #{tpu_custom_call.1} parent=5 // pred_fallthru
        _
      %p207 = scmp.lt.s32.totalorder %s21, 4
      // Predicated region
      $region17: #{tpu_custom_call.1} parent=5 // pred_check
        %p208 = pneg %p207
      $region18: #{tpu_custom_call.1} parent=5 // pred_check_branch
        %210 = sbr.rel (%p208) target = $region20
      $region19: #{tpu_custom_call.1} parent=5 // pred_region
        // Predicated region
        $region21: #{tpu_custom_call.1} parent=19 // pred_check
          %p211 = pneg %p64
        $region22: #{tpu_custom_call.1} parent=19 // pred_check_branch
          %213 = sbr.rel (%p211) target = $region24
        $region23: #{tpu_custom_call.1} parent=19 // pred_region
          #allocation12 [shape = 'u32[6]{0}', space=smem, size = 0x18, scoped, tag = 'DMA stride descriptor']
          %s214 = sand.u32 %s54, 1
          %s215 = scalar_lea.sflag [#allocation3], %s214
          %s216 = sand.u32 %s54, 1
          %s217 = smul.addr %s216, 144
          %s218 = scalar_lea.vmem [#allocation2], %s217
          %s219 = smul.u32 3, %s29
          %s220 = smul.u32 3, %s30
          %s222 = ssub.s32 2304, 2304
          %223 = vsyncadd %s215, %s222
          %s224 = smul.addr %s219, 3
          %s225 = sadd.s32 %s220, %s224
          %s226 = smul.addr %s28, 36
          %s227 = sadd.s32 %s225, %s226
          %s228 = smul.addr %s227, 128
          %s229 = scalar_lea.hbm %s0, %s228
          %s231 = sshll.u32 1, 14
          %s232 = sxor.u32 4294967295, %s231
          %s234 = sld [smem:[#allocation0]]
          %s235 = sadd.s32 2, %s234
          %s237 = sshll.u32 7, 26
          %s238 = sxor.u32 4294967295, %s237
          %s239 = sand.u32 0, %s238
          %s240 = sshll.u32 %s235, 26
          %s241 = sor.u32 %s239, %s240
          %s242 = sshll.u32 %s218, 4
          %s243 = int_to_ptr.vmem [resolvable:$true] %s242
          %249 = sst [smem:[#allocation12]] 2304
          %s250 = scalar_lea.smem [#allocation12], 1
          %251 = sst [smem:[%s250]] 1152
          %s252 = scalar_lea.smem [#allocation12], 2
          %253 = sst [smem:[%s252]] 3
          %s254 = scalar_lea.smem [#allocation12], 3
          %255 = sst [smem:[%s254]] 384
          %s256 = scalar_lea.smem [#allocation12], 4
          %257 = sst [smem:[%s256]] 384
          %s258 = scalar_lea.smem [#allocation12], 5
          %259 = sst [smem:[%s258]] 24
          %261 = dma.general %s229, 2304, %s243, %s215, [#allocation11], [#allocation12], %s241, 0
        $region24: #{tpu_custom_call.1} parent=19 // pred_fallthru
          _
      $region20: #{tpu_custom_call.1} parent=5 // pred_fallthru
        _
      %p262 = scmp.le.s32.totalorder 1, %s21
      %p263 = scmp.lt.s32.totalorder %s21, 5
      %p264 = pnand %p262, %p263
      %p265 = pneg %p264
      // Predicated region
      $region25: #{tpu_custom_call.1} parent=5 // pred_check
        _
      $region26: #{tpu_custom_call.1} parent=5 // pred_check_branch
        %267 = sbr.rel (%p264) target = $region28
      $region27: #{tpu_custom_call.1} parent=5 // pred_region
        %s268 = ssub.s32 %s21, 1
        %s269 = sand.u32 %s57, 1
        %s270 = scalar_lea.sflag [#allocation3], %s269
        %s271 = sand.u32 %s57, 1
        %s272 = smul.addr %s271, 144
        %s273 = scalar_lea.vmem [#allocation2], %s272
        // Predicated region
        $region29: #{tpu_custom_call.1} parent=27 // pred_check
          %p274 = pneg %p70
        $region30: #{tpu_custom_call.1} parent=27 // pred_check_branch
          %276 = sbr.rel (%p274) target = $region32
        $region31: #{tpu_custom_call.1} parent=27 // pred_region
          %277 = dma.done %s270, 2304
        $region32: #{tpu_custom_call.1} parent=27 // pred_fallthru
          _
        // Predicated region
        $region33: #{tpu_custom_call.1} parent=27 // pred_check
          %p278 = pneg %p91
        $region34: #{tpu_custom_call.1} parent=27 // pred_check_branch
          %280 = sbr.rel (%p278) target = $region36
        $region35: #{tpu_custom_call.1} parent=27 // pred_region
          %281 = dma.done [#allocation5], 32
        $region36: #{tpu_custom_call.1} parent=27 // pred_fallthru
          _
        %282 = sfence
        %s283 = sand.u32 %s57, 1
        %s284 = scalar_lea.sflag [#allocation3], %s283
        %s285 = sand.u32 %s57, 1
        %s286 = smul.addr %s285, 144
        %s287 = scalar_lea.vmem [#allocation2], %s286
        %p288 = pneg %p70
        %p289 = pneg %p67
        %p290 = pneg %p91
        %p291 = pneg %p88
        %p292 = pneg %p121
        %p293 = pneg %p118
        %s294 = sand.u32 %s108, 1
        %s295 = scalar_lea.sflag [#allocation4], %s294
        %s296 = sand.u32 %s108, 1
        %s297 = smul.addr %s296, 216
        %s298 = scalar_lea.vmem [#allocation7], %s297
        %p299 = pneg %p151
        %p300 = pneg %p148
        %s301 = sand.u32 %s26, 1
        %s302 = scalar_lea.sflag [#allocation9], %s301
        %s303 = sand.u32 %s138, 1
        %s304 = smul.addr %s303, 216
        %s305 = scalar_lea.vmem [#allocation8], %s304
        %p306 = pneg %p181
        %p307 = pneg %p178
        %s308 = sand.u32 %s26, 1
        %s309 = scalar_lea.sflag [#allocation9], %s308
        %s310 = sand.u32 %s168, 1
        %s311 = smul.addr %s310, 216
        %s312 = scalar_lea.vmem [#allocation10], %s311
        %s313 = smul.u32 3, %s32
        %s314 = smul.u32 3, %s33
        %s315 = smul.u32 3, %s32
        %s316 = smul.u32 3, %s33
        %s317 = smul.u32 3, %s32
        %s318 = smul.u32 3, %s33
        %s319 = smul.u32 3, %s32
        %s320 = smul.u32 3, %s33
        %s321 = smul.u32 %s32, 24
        %s322 = smul.u32 %s33, 384
        %v323 = vlaneseq
        %v324 = vshrl.u32 %v323, 7
        %v325 = vadd.s32 %v324, 8
        %v326 = vadd.s32 %v324, 16
        %v327 = vstv %s321
        %v328 = vadd.s32 %v324, %v327
        %v329 = vadd.s32 %v325, %v327
        %v330 = vadd.s32 %v326, %v327
        %v331 = vcvt.s32.f32 %v328
        %v332 = vcvt.s32.f32 %v329
        %v333 = vcvt.s32.f32 %v330
        %v334 = vlaneseq
        %v335 = vand.u32 %v334, 127
        %v336 = vadd.s32 %v335, 128
        %v337 = vadd.s32 %v335, 256
        %v338 = vstv %s322
        %v339 = vadd.s32 %v335, %v338
        %v340 = vadd.s32 %v336, %v338
        %v341 = vadd.s32 %v337, %v338
        %v342 = vcvt.s32.f32 %v339
        %v343 = vcvt.s32.f32 %v340
        %v344 = vcvt.s32.f32 %v341
        %v345 = vld [vmem:[%s273] sm:$0xff]
        %v346 = vld [vmem:[%s273 + $0x8] sm:$0xff]
        %v347 = vld [vmem:[%s273 + $0x10] sm:$0xff]
        %v348 = vld [vmem:[%s273 + $0x18] sm:$0xff]
        %v349 = vld [vmem:[%s273 + $0x20] sm:$0xff]
        %v350 = vld [vmem:[%s273 + $0x28] sm:$0xff]
        %v351 = vld [vmem:[%s273 + $0x30] sm:$0xff]
        %v352 = vld [vmem:[%s273 + $0x38] sm:$0xff]
        %v353 = vld [vmem:[%s273 + $0x40] sm:$0xff]
        %v354 = vadd.f32 %v342, %v345
        %v355 = vadd.f32 %v343, %v346
        %v356 = vadd.f32 %v344, %v347
        %v357 = vadd.f32 %v342, %v348
        %v358 = vadd.f32 %v343, %v349
        %v359 = vadd.f32 %v344, %v350
        %v360 = vadd.f32 %v342, %v351
        %v361 = vadd.f32 %v343, %v352
        %v362 = vadd.f32 %v344, %v353
        %s363 = scalar_lea.vmem %s273, 72 [#allocation2]
        %v364 = vld [vmem:[%s363] sm:$0xff]
        %v365 = vld [vmem:[%s363 + $0x8] sm:$0xff]
        %v366 = vld [vmem:[%s363 + $0x10] sm:$0xff]
        %v367 = vld [vmem:[%s363 + $0x18] sm:$0xff]
        %v368 = vld [vmem:[%s363 + $0x20] sm:$0xff]
        %v369 = vld [vmem:[%s363 + $0x28] sm:$0xff]
        %v370 = vld [vmem:[%s363 + $0x30] sm:$0xff]
        %v371 = vld [vmem:[%s363 + $0x38] sm:$0xff]
        %v372 = vld [vmem:[%s363 + $0x40] sm:$0xff]
        %v373 = vadd.f32 %v331, %v364
        %v374 = vadd.f32 %v331, %v365
        %v375 = vadd.f32 %v331, %v366
        %v376 = vadd.f32 %v332, %v367
        %v377 = vadd.f32 %v332, %v368
        %v378 = vadd.f32 %v332, %v369
        %v379 = vadd.f32 %v333, %v370
        %v380 = vadd.f32 %v333, %v371
        %v381 = vadd.f32 %v333, %v372
        %382 = vst [vmem:[%s298] sm:$0xff] %v354
        %383 = vst [vmem:[%s298 + $0x8] sm:$0xff] %v355
        %384 = vst [vmem:[%s298 + $0x10] sm:$0xff] %v356
        %385 = vst [vmem:[%s298 + $0x18] sm:$0xff] %v357
        %386 = vst [vmem:[%s298 + $0x20] sm:$0xff] %v358
        %387 = vst [vmem:[%s298 + $0x28] sm:$0xff] %v359
        %388 = vst [vmem:[%s298 + $0x30] sm:$0xff] %v360
        %389 = vst [vmem:[%s298 + $0x38] sm:$0xff] %v361
        %390 = vst [vmem:[%s298 + $0x40] sm:$0xff] %v362
        %s391 = scalar_lea.vmem %s298, 72 [#allocation7]
        %392 = vst [vmem:[%s391] sm:$0xff] %v373
        %393 = vst [vmem:[%s391 + $0x8] sm:$0xff] %v374
        %394 = vst [vmem:[%s391 + $0x10] sm:$0xff] %v375
        %395 = vst [vmem:[%s391 + $0x18] sm:$0xff] %v376
        %396 = vst [vmem:[%s391 + $0x20] sm:$0xff] %v377
        %397 = vst [vmem:[%s391 + $0x28] sm:$0xff] %v378
        %398 = vst [vmem:[%s391 + $0x30] sm:$0xff] %v379
        %399 = vst [vmem:[%s391 + $0x38] sm:$0xff] %v380
        %400 = vst [vmem:[%s391 + $0x40] sm:$0xff] %v381
        %s401 = scalar_lea.vmem %s298, 144 [#allocation7]
        %402 = vst [vmem:[%s401] sm:$0xff] 1.0
        %403 = vst [vmem:[%s401 + $0x8] sm:$0xff] 1.0
        %404 = vst [vmem:[%s401 + $0x10] sm:$0xff] 1.0
        %405 = vst [vmem:[%s401 + $0x18] sm:$0xff] 1.0
        %406 = vst [vmem:[%s401 + $0x20] sm:$0xff] 1.0
        %407 = vst [vmem:[%s401 + $0x28] sm:$0xff] 1.0
        %408 = vst [vmem:[%s401 + $0x30] sm:$0xff] 1.0
        %409 = vst [vmem:[%s401 + $0x38] sm:$0xff] 1.0
        %410 = vst [vmem:[%s401 + $0x40] sm:$0xff] 1.0
        %s411 = smul.u32 %s31, 128
        %s412 = sld [smem:[#allocation6 + %s411]]
        %s413 = sadd.s32 %s411, 1
        %s414 = sld [smem:[#allocation6 + %s413]]
        %s415 = sadd.s32 %s411, 2
        %s416 = sld [smem:[#allocation6 + %s415]]
        %s417 = sadd.s32 %s411, 3
        %s418 = sld [smem:[#allocation6 + %s417]]
        %s419 = sadd.s32 %s411, 4
        %s420 = sld [smem:[#allocation6 + %s419]]
        %s421 = sadd.s32 %s411, 5
        %s422 = sld [smem:[#allocation6 + %s421]]
        %s423 = sadd.s32 %s411, 6
        %s424 = sld [smem:[#allocation6 + %s423]]
        %s425 = sadd.s32 %s411, 7
        %s426 = sld [smem:[#allocation6 + %s425]]
        %s427 = sadd.s32 %s411, 8
        %s428 = sld [smem:[#allocation6 + %s427]]
        %v429 = vstv %s412
        %v430 = vmul.f32 %v429, %v342
        %v431 = vmul.f32 %v429, %v343
        %v432 = vmul.f32 %v429, %v344
        %v433 = vstv %s414
        %v434 = vmul.f32 %v433, %v331
        %v435 = vmul.f32 %v433, %v332
        %v436 = vmul.f32 %v433, %v333
        %v437 = vadd.f32 %v430, %v434
        %v438 = vadd.f32 %v431, %v434
        %v439 = vadd.f32 %v432, %v434
        %v440 = vadd.f32 %v430, %v435
        %v441 = vadd.f32 %v431, %v435
        %v442 = vadd.f32 %v432, %v435
        %v443 = vadd.f32 %v430, %v436
        %v444 = vadd.f32 %v431, %v436
        %v445 = vadd.f32 %v432, %v436
        %v446 = vstv %s416
        %v447 = vadd.f32 %v437, %v446
        %v448 = vadd.f32 %v438, %v446
        %v449 = vadd.f32 %v439, %v446
        %v450 = vadd.f32 %v440, %v446
        %v451 = vadd.f32 %v441, %v446
        %v452 = vadd.f32 %v442, %v446
        %v453 = vadd.f32 %v443, %v446
        %v454 = vadd.f32 %v444, %v446
        %v455 = vadd.f32 %v445, %v446
        %456 = vst [vmem:[%s305] sm:$0xff] %v447
        %457 = vst [vmem:[%s305 + $0x8] sm:$0xff] %v448
        %458 = vst [vmem:[%s305 + $0x10] sm:$0xff] %v449
        %459 = vst [vmem:[%s305 + $0x18] sm:$0xff] %v450
        %460 = vst [vmem:[%s305 + $0x20] sm:$0xff] %v451
        %461 = vst [vmem:[%s305 + $0x28] sm:$0xff] %v452
        %462 = vst [vmem:[%s305 + $0x30] sm:$0xff] %v453
        %463 = vst [vmem:[%s305 + $0x38] sm:$0xff] %v454
        %464 = vst [vmem:[%s305 + $0x40] sm:$0xff] %v455
        %v465 = vstv %s418
        %v466 = vmul.f32 %v465, %v342
        %v467 = vmul.f32 %v465, %v343
        %v468 = vmul.f32 %v465, %v344
        %v469 = vstv %s420
        %v470 = vmul.f32 %v469, %v331
        %v471 = vmul.f32 %v469, %v332
        %v472 = vmul.f32 %v469, %v333
        %v473 = vadd.f32 %v466, %v470
        %v474 = vadd.f32 %v467, %v470
        %v475 = vadd.f32 %v468, %v470
        %v476 = vadd.f32 %v466, %v471
        %v477 = vadd.f32 %v467, %v471
        %v478 = vadd.f32 %v468, %v471
        %v479 = vadd.f32 %v466, %v472
        %v480 = vadd.f32 %v467, %v472
        %v481 = vadd.f32 %v468, %v472
        %v482 = vstv %s422
        %v483 = vadd.f32 %v473, %v482
        %v484 = vadd.f32 %v474, %v482
        %v485 = vadd.f32 %v475, %v482
        %v486 = vadd.f32 %v476, %v482
        %v487 = vadd.f32 %v477, %v482
        %v488 = vadd.f32 %v478, %v482
        %v489 = vadd.f32 %v479, %v482
        %v490 = vadd.f32 %v480, %v482
        %v491 = vadd.f32 %v481, %v482
        %s492 = scalar_lea.vmem %s305, 72 [#allocation8]
        %493 = vst [vmem:[%s492] sm:$0xff] %v483
        %494 = vst [vmem:[%s492 + $0x8] sm:$0xff] %v484
        %495 = vst [vmem:[%s492 + $0x10] sm:$0xff] %v485
        %496 = vst [vmem:[%s492 + $0x18] sm:$0xff] %v486
        %497 = vst [vmem:[%s492 + $0x20] sm:$0xff] %v487
        %498 = vst [vmem:[%s492 + $0x28] sm:$0xff] %v488
        %499 = vst [vmem:[%s492 + $0x30] sm:$0xff] %v489
        %500 = vst [vmem:[%s492 + $0x38] sm:$0xff] %v490
        %501 = vst [vmem:[%s492 + $0x40] sm:$0xff] %v491
        %v502 = vstv %s424
        %v503 = vmul.f32 %v502, %v342
        %v504 = vmul.f32 %v502, %v343
        %v505 = vmul.f32 %v502, %v344
        %v506 = vstv %s426
        %v507 = vmul.f32 %v506, %v331
        %v508 = vmul.f32 %v506, %v332
        %v509 = vmul.f32 %v506, %v333
        %v510 = vadd.f32 %v503, %v507
        %v511 = vadd.f32 %v504, %v507
        %v512 = vadd.f32 %v505, %v507
        %v513 = vadd.f32 %v503, %v508
        %v514 = vadd.f32 %v504, %v508
        %v515 = vadd.f32 %v505, %v508
        %v516 = vadd.f32 %v503, %v509
        %v517 = vadd.f32 %v504, %v509
        %v518 = vadd.f32 %v505, %v509
        %v519 = vstv %s428
        %v520 = vadd.f32 %v510, %v519
        %v521 = vadd.f32 %v511, %v519
        %v522 = vadd.f32 %v512, %v519
        %v523 = vadd.f32 %v513, %v519
        %v524 = vadd.f32 %v514, %v519
        %v525 = vadd.f32 %v515, %v519
        %v526 = vadd.f32 %v516, %v519
        %v527 = vadd.f32 %v517, %v519
        %v528 = vadd.f32 %v518, %v519
        %s529 = scalar_lea.vmem %s305, 144 [#allocation8]
        %530 = vst [vmem:[%s529] sm:$0xff] %v520
        %531 = vst [vmem:[%s529 + $0x8] sm:$0xff] %v521
        %532 = vst [vmem:[%s529 + $0x10] sm:$0xff] %v522
        %533 = vst [vmem:[%s529 + $0x18] sm:$0xff] %v523
        %534 = vst [vmem:[%s529 + $0x20] sm:$0xff] %v524
        %535 = vst [vmem:[%s529 + $0x28] sm:$0xff] %v525
        %536 = vst [vmem:[%s529 + $0x30] sm:$0xff] %v526
        %537 = vst [vmem:[%s529 + $0x38] sm:$0xff] %v527
        %538 = vst [vmem:[%s529 + $0x40] sm:$0xff] %v528
        %v539 = vmul.f32 %v429, %v354
        %v540 = vmul.f32 %v429, %v355
        %v541 = vmul.f32 %v429, %v356
        %v542 = vmul.f32 %v429, %v357
        %v543 = vmul.f32 %v429, %v358
        %v544 = vmul.f32 %v429, %v359
        %v545 = vmul.f32 %v429, %v360
        %v546 = vmul.f32 %v429, %v361
        %v547 = vmul.f32 %v429, %v362
        %v548 = vmul.f32 %v433, %v373
        %v549 = vmul.f32 %v433, %v374
        %v550 = vmul.f32 %v433, %v375
        %v551 = vmul.f32 %v433, %v376
        %v552 = vmul.f32 %v433, %v377
        %v553 = vmul.f32 %v433, %v378
        %v554 = vmul.f32 %v433, %v379
        %v555 = vmul.f32 %v433, %v380
        %v556 = vmul.f32 %v433, %v381
        %v557 = vadd.f32 %v539, %v548
        %v558 = vadd.f32 %v540, %v549
        %v559 = vadd.f32 %v541, %v550
        %v560 = vadd.f32 %v542, %v551
        %v561 = vadd.f32 %v543, %v552
        %v562 = vadd.f32 %v544, %v553
        %v563 = vadd.f32 %v545, %v554
        %v564 = vadd.f32 %v546, %v555
        %v565 = vadd.f32 %v547, %v556
        %v566 = vadd.f32 %v557, %v446
        %v567 = vadd.f32 %v558, %v446
        %v568 = vadd.f32 %v559, %v446
        %v569 = vadd.f32 %v560, %v446
        %v570 = vadd.f32 %v561, %v446
        %v571 = vadd.f32 %v562, %v446
        %v572 = vadd.f32 %v563, %v446
        %v573 = vadd.f32 %v564, %v446
        %v574 = vadd.f32 %v565, %v446
        %575 = vst [vmem:[%s312] sm:$0xff] %v566
        %576 = vst [vmem:[%s312 + $0x8] sm:$0xff] %v567
        %577 = vst [vmem:[%s312 + $0x10] sm:$0xff] %v568
        %578 = vst [vmem:[%s312 + $0x18] sm:$0xff] %v569
        %579 = vst [vmem:[%s312 + $0x20] sm:$0xff] %v570
        %580 = vst [vmem:[%s312 + $0x28] sm:$0xff] %v571
        %581 = vst [vmem:[%s312 + $0x30] sm:$0xff] %v572
        %582 = vst [vmem:[%s312 + $0x38] sm:$0xff] %v573
        %583 = vst [vmem:[%s312 + $0x40] sm:$0xff] %v574
        %v584 = vmul.f32 %v465, %v354
        %v585 = vmul.f32 %v465, %v355
        %v586 = vmul.f32 %v465, %v356
        %v587 = vmul.f32 %v465, %v357
        %v588 = vmul.f32 %v465, %v358
        %v589 = vmul.f32 %v465, %v359
        %v590 = vmul.f32 %v465, %v360
        %v591 = vmul.f32 %v465, %v361
        %v592 = vmul.f32 %v465, %v362
        %v593 = vmul.f32 %v469, %v373
        %v594 = vmul.f32 %v469, %v374
        %v595 = vmul.f32 %v469, %v375
        %v596 = vmul.f32 %v469, %v376
        %v597 = vmul.f32 %v469, %v377
        %v598 = vmul.f32 %v469, %v378
        %v599 = vmul.f32 %v469, %v379
        %v600 = vmul.f32 %v469, %v380
        %v601 = vmul.f32 %v469, %v381
        %v602 = vadd.f32 %v584, %v593
        %v603 = vadd.f32 %v585, %v594
        %v604 = vadd.f32 %v586, %v595
        %v605 = vadd.f32 %v587, %v596
        %v606 = vadd.f32 %v588, %v597
        %v607 = vadd.f32 %v589, %v598
        %v608 = vadd.f32 %v590, %v599
        %v609 = vadd.f32 %v591, %v600
        %v610 = vadd.f32 %v592, %v601
        %v611 = vadd.f32 %v602, %v482
        %v612 = vadd.f32 %v603, %v482
        %v613 = vadd.f32 %v604, %v482
        %v614 = vadd.f32 %v605, %v482
        %v615 = vadd.f32 %v606, %v482
        %v616 = vadd.f32 %v607, %v482
        %v617 = vadd.f32 %v608, %v482
        %v618 = vadd.f32 %v609, %v482
        %v619 = vadd.f32 %v610, %v482
        %s620 = scalar_lea.vmem %s312, 72 [#allocation10]
        %621 = vst [vmem:[%s620] sm:$0xff] %v611
        %622 = vst [vmem:[%s620 + $0x8] sm:$0xff] %v612
        %623 = vst [vmem:[%s620 + $0x10] sm:$0xff] %v613
        %624 = vst [vmem:[%s620 + $0x18] sm:$0xff] %v614
        %625 = vst [vmem:[%s620 + $0x20] sm:$0xff] %v615
        %626 = vst [vmem:[%s620 + $0x28] sm:$0xff] %v616
        %627 = vst [vmem:[%s620 + $0x30] sm:$0xff] %v617
        %628 = vst [vmem:[%s620 + $0x38] sm:$0xff] %v618
        %629 = vst [vmem:[%s620 + $0x40] sm:$0xff] %v619
        %v630 = vmul.f32 %v502, %v354
        %v631 = vmul.f32 %v502, %v355
        %v632 = vmul.f32 %v502, %v356
        %v633 = vmul.f32 %v502, %v357
        %v634 = vmul.f32 %v502, %v358
        %v635 = vmul.f32 %v502, %v359
        %v636 = vmul.f32 %v502, %v360
        %v637 = vmul.f32 %v502, %v361
        %v638 = vmul.f32 %v502, %v362
        %v639 = vmul.f32 %v506, %v373
        %v640 = vmul.f32 %v506, %v374
        %v641 = vmul.f32 %v506, %v375
        %v642 = vmul.f32 %v506, %v376
        %v643 = vmul.f32 %v506, %v377
        %v644 = vmul.f32 %v506, %v378
        %v645 = vmul.f32 %v506, %v379
        %v646 = vmul.f32 %v506, %v380
        %v647 = vmul.f32 %v506, %v381
        %v648 = vadd.f32 %v630, %v639
        %v649 = vadd.f32 %v631, %v640
        %v650 = vadd.f32 %v632, %v641
        %v651 = vadd.f32 %v633, %v642
        %v652 = vadd.f32 %v634, %v643
        %v653 = vadd.f32 %v635, %v644
        %v654 = vadd.f32 %v636, %v645
        %v655 = vadd.f32 %v637, %v646
        %v656 = vadd.f32 %v638, %v647
        %v657 = vadd.f32 %v648, %v519
        %v658 = vadd.f32 %v649, %v519
        %v659 = vadd.f32 %v650, %v519
        %v660 = vadd.f32 %v651, %v519
        %v661 = vadd.f32 %v652, %v519
        %v662 = vadd.f32 %v653, %v519
        %v663 = vadd.f32 %v654, %v519
        %v664 = vadd.f32 %v655, %v519
        %v665 = vadd.f32 %v656, %v519
        %s666 = scalar_lea.vmem %s312, 144 [#allocation10]
        %667 = vst [vmem:[%s666] sm:$0xff] %v657
        %668 = vst [vmem:[%s666 + $0x8] sm:$0xff] %v658
        %669 = vst [vmem:[%s666 + $0x10] sm:$0xff] %v659
        %670 = vst [vmem:[%s666 + $0x18] sm:$0xff] %v660
        %671 = vst [vmem:[%s666 + $0x20] sm:$0xff] %v661
        %672 = vst [vmem:[%s666 + $0x28] sm:$0xff] %v662
        %673 = vst [vmem:[%s666 + $0x30] sm:$0xff] %v663
        %674 = vst [vmem:[%s666 + $0x38] sm:$0xff] %v664
        %675 = vst [vmem:[%s666 + $0x40] sm:$0xff] %v665
        %s676 = sand.u32 %s108, 1
        %s677 = scalar_lea.sflag [#allocation4], %s676
        %s678 = sand.u32 %s108, 1
        %s679 = smul.addr %s678, 216
        %s680 = scalar_lea.vmem [#allocation7], %s679
        %s681 = sand.u32 %s26, 1
        %s682 = scalar_lea.sflag [#allocation9], %s681
        %s683 = sand.u32 %s138, 1
        %s684 = smul.addr %s683, 216
        %s685 = scalar_lea.vmem [#allocation8], %s684
        %s686 = sand.u32 %s26, 1
        %s687 = scalar_lea.sflag [#allocation9], %s686
        %s688 = sand.u32 %s168, 1
        %s689 = smul.addr %s688, 216
        %s690 = scalar_lea.vmem [#allocation10], %s689
        // Predicated region
        $region37: #{tpu_custom_call.1} parent=27 // pred_check
          %p691 = pneg %p118
        $region38: #{tpu_custom_call.1} parent=27 // pred_check_branch
          %693 = sbr.rel (%p691) target = $region40
        $region39: #{tpu_custom_call.1} parent=27 // pred_region
          #allocation14 [shape = 'u32[6]{0}', space=smem, size = 0x18, scoped, tag = 'DMA stride descriptor']
          %s694 = smul.u32 3, %s32
          %s695 = smul.u32 3, %s33
          %s697 = ssub.s32 3456, 3456
          %698 = vsyncadd %s677, %s697
          %s699 = smul.addr %s694, 3
          %s700 = sadd.s32 %s695, %s699
          %s701 = smul.addr %s31, 54
          %s702 = sadd.s32 %s700, %s701
          %s703 = smul.addr %s702, 128
          %s704 = scalar_lea.hbm %s2, %s703
          %s706 = sshll.u32 1, 14
          %s707 = sxor.u32 4294967295, %s706
          %s710 = sshll.u32 7, 18
          %s711 = sxor.u32 4294967295, %s710
          %s712 = sand.u32 0, %s711
          %s714 = sor.u32 %s712, 0
          %s716 = sshll.u32 3, 24
          %s717 = sxor.u32 4294967295, %s716
          %s718 = sand.u32 %s714, %s717
          %s720 = sor.u32 %s718, 0
          %s721 = sshll.u32 %s680, 4
          %s722 = int_to_ptr.vmem [resolvable:$true] %s721
          %728 = sst [smem:[#allocation14]] 1152
          %s729 = scalar_lea.smem [#allocation14], 1
          %730 = sst [smem:[%s729]] 2304
          %s731 = scalar_lea.smem [#allocation14], 2
          %732 = sst [smem:[%s731]] 3
          %s733 = scalar_lea.smem [#allocation14], 3
          %734 = sst [smem:[%s733]] 384
          %s735 = scalar_lea.smem [#allocation14], 4
          %736 = sst [smem:[%s735]] 384
          %s737 = scalar_lea.smem [#allocation14], 5
          %738 = sst [smem:[%s737]] 24
          %740 = dma.general %s722, 3456, %s704, %s677, [#allocation13], [#allocation14], %s720, 0
        $region40: #{tpu_custom_call.1} parent=27 // pred_fallthru
          _
        // Predicated region
        $region41: #{tpu_custom_call.1} parent=27 // pred_check
          %p741 = pneg %p148
        $region42: #{tpu_custom_call.1} parent=27 // pred_check_branch
          %743 = sbr.rel (%p741) target = $region44
        $region43: #{tpu_custom_call.1} parent=27 // pred_region
          #allocation16 [shape = 'u32[6]{0}', space=smem, size = 0x18, scoped, tag = 'DMA stride descriptor']
          %s744 = smul.u32 3, %s32
          %s745 = smul.u32 3, %s33
          %s747 = ssub.s32 3456, 3456
          %748 = vsyncadd %s682, %s747
          %s749 = smul.addr %s744, 3
          %s750 = sadd.s32 %s745, %s749
          %s751 = smul.addr %s31, 54
          %s752 = sadd.s32 %s750, %s751
          %s753 = smul.addr %s752, 128
          %s754 = scalar_lea.hbm %s3, %s753
          %s756 = sshll.u32 1, 14
          %s757 = sxor.u32 4294967295, %s756
          %s760 = sshll.u32 7, 18
          %s761 = sxor.u32 4294967295, %s760
          %s762 = sand.u32 0, %s761
          %s764 = sor.u32 %s762, 0
          %s766 = sshll.u32 3, 24
          %s767 = sxor.u32 4294967295, %s766
          %s768 = sand.u32 %s764, %s767
          %s770 = sor.u32 %s768, 0
          %s771 = sshll.u32 %s685, 4
          %s772 = int_to_ptr.vmem [resolvable:$true] %s771
          %778 = sst [smem:[#allocation16]] 1152
          %s779 = scalar_lea.smem [#allocation16], 1
          %780 = sst [smem:[%s779]] 2304
          %s781 = scalar_lea.smem [#allocation16], 2
          %782 = sst [smem:[%s781]] 3
          %s783 = scalar_lea.smem [#allocation16], 3
          %784 = sst [smem:[%s783]] 384
          %s785 = scalar_lea.smem [#allocation16], 4
          %786 = sst [smem:[%s785]] 384
          %s787 = scalar_lea.smem [#allocation16], 5
          %788 = sst [smem:[%s787]] 24
          %790 = dma.general %s772, 3456, %s754, %s682, [#allocation15], [#allocation16], %s770, 0
        $region44: #{tpu_custom_call.1} parent=27 // pred_fallthru
          _
        // Predicated region
        $region45: #{tpu_custom_call.1} parent=27 // pred_check
          %p791 = pneg %p178
        $region46: #{tpu_custom_call.1} parent=27 // pred_check_branch
          %793 = sbr.rel (%p791) target = $region48
        $region47: #{tpu_custom_call.1} parent=27 // pred_region
          #allocation18 [shape = 'u32[6]{0}', space=smem, size = 0x18, scoped, tag = 'DMA stride descriptor']
          %s794 = smul.u32 3, %s32
          %s795 = smul.u32 3, %s33
          %s797 = ssub.s32 3456, 3456
          %798 = vsyncadd %s687, %s797
          %s799 = smul.addr %s794, 3
          %s800 = sadd.s32 %s795, %s799
          %s801 = smul.addr %s31, 54
          %s802 = sadd.s32 %s800, %s801
          %s803 = smul.addr %s802, 128
          %s804 = scalar_lea.hbm %s4, %s803
          %s806 = sshll.u32 1, 14
          %s807 = sxor.u32 4294967295, %s806
          %s810 = sshll.u32 7, 18
          %s811 = sxor.u32 4294967295, %s810
          %s812 = sand.u32 0, %s811
          %s814 = sor.u32 %s812, 0
          %s816 = sshll.u32 3, 24
          %s817 = sxor.u32 4294967295, %s816
          %s818 = sand.u32 %s814, %s817
          %s820 = sor.u32 %s818, 0
          %s821 = sshll.u32 %s690, 4
          %s822 = int_to_ptr.vmem [resolvable:$true] %s821
          %828 = sst [smem:[#allocation18]] 1152
          %s829 = scalar_lea.smem [#allocation18], 1
          %830 = sst [smem:[%s829]] 2304
          %s831 = scalar_lea.smem [#allocation18], 2
          %832 = sst [smem:[%s831]] 3
          %s833 = scalar_lea.smem [#allocation18], 3
          %834 = sst [smem:[%s833]] 384
          %s835 = scalar_lea.smem [#allocation18], 4
          %836 = sst [smem:[%s835]] 384
          %s837 = scalar_lea.smem [#allocation18], 5
          %838 = sst [smem:[%s837]] 24
          %840 = dma.general %s822, 3456, %s804, %s687, [#allocation17], [#allocation18], %s820, 0
        $region48: #{tpu_custom_call.1} parent=27 // pred_fallthru
          _
      $region28: #{tpu_custom_call.1} parent=5 // pred_fallthru
        _
      %p841 = scmp.le.s32.totalorder 2, %s21
      // Predicated region
      $region49: #{tpu_custom_call.1} parent=5 // pred_check
        %p842 = pneg %p841
      $region50: #{tpu_custom_call.1} parent=5 // pred_check_branch
        %844 = sbr.rel (%p842) target = $region52
      $region51: #{tpu_custom_call.1} parent=5 // pred_region
        %s845 = ssub.s32 %s21, 2
        // Predicated region
        $region53: #{tpu_custom_call.1} parent=51 // pred_check
          %p846 = pneg %p124
        $region54: #{tpu_custom_call.1} parent=51 // pred_check_branch
          %848 = sbr.rel (%p846) target = $region56
        $region55: #{tpu_custom_call.1} parent=51 // pred_region
          %s849 = sand.u32 %s109, 1
          %s850 = scalar_lea.sflag [#allocation4], %s849
          %s851 = sand.u32 %s109, 1
          %s852 = smul.addr %s851, 216
          %s853 = scalar_lea.vmem [#allocation7], %s852
          %854 = dma.done %s850, 3456
        $region56: #{tpu_custom_call.1} parent=51 // pred_fallthru
          _
        // Predicated region
        $region57: #{tpu_custom_call.1} parent=51 // pred_check
          %p855 = pneg %p154
        $region58: #{tpu_custom_call.1} parent=51 // pred_check_branch
          %857 = sbr.rel (%p855) target = $region60
        $region59: #{tpu_custom_call.1} parent=51 // pred_region
          %s858 = sand.u32 %s27, 1
          %s859 = scalar_lea.sflag [#allocation9], %s858
          %s860 = sand.u32 %s139, 1
          %s861 = smul.addr %s860, 216
          %s862 = scalar_lea.vmem [#allocation8], %s861
          %863 = dma.done %s859, 3456
        $region60: #{tpu_custom_call.1} parent=51 // pred_fallthru
          _
        // Predicated region
        $region61: #{tpu_custom_call.1} parent=51 // pred_check
          %p864 = pneg %p184
        $region62: #{tpu_custom_call.1} parent=51 // pred_check_branch
          %866 = sbr.rel (%p864) target = $region64
        $region63: #{tpu_custom_call.1} parent=51 // pred_region
          %s867 = sand.u32 %s27, 1
          %s868 = scalar_lea.sflag [#allocation9], %s867
          %s869 = sand.u32 %s169, 1
          %s870 = smul.addr %s869, 216
          %s871 = scalar_lea.vmem [#allocation10], %s870
          %872 = dma.done %s868, 3456
        $region64: #{tpu_custom_call.1} parent=51 // pred_fallthru
          _
      $region52: #{tpu_custom_call.1} parent=5 // pred_fallthru
        _
    $region6: #{tpu_custom_call.1} parent=1 // loop_footer
      %s25 = sadd.s32 1, %s21
    $region7: #{tpu_custom_call.1} parent=1 // loop_footer_branch
      %20 = sbr.rel target = $region3
    $region8: #{tpu_custom_call.1} parent=1 // loop_exit
      _
    %873 = vsyncpa [#allocation3], 1
    %s874 = scalar_lea.sflag [#allocation3], 1
    %875 = vsyncpa %s874, 1
    %876 = vsyncpa [#allocation4], 1
    %s877 = scalar_lea.sflag [#allocation4], 1
    %878 = vsyncpa %s877, 1
    %879 = vsyncpa [#allocation9], 1
    %s880 = scalar_lea.sflag [#allocation9], 1
    %881 = vsyncpa %s880, 1
    %882 = vsyncpa [#allocation5], 1
    %s883 = scalar_lea.sflag [#allocation5], 1
    %884 = vsyncpa %s883, 1

</llo_original>
